<compile_context>
chip_gen: v6e
topology: v6e:2x2x1
jax: 0.10.0
libtpu: 0.0.40
codegen_flags: <defaults>
</compile_context>

<pallas_src>
import jax
import jax.numpy as jnp
from jax.experimental import pallas as pl
from jax.experimental.pallas import tpu as pltpu


def _etoy_kernel(e_ref, m_ref, w_ref, b_ref, o_ref,
                 s_sum, s_summ, s_sum2m, s_min, s_max, s_cnt):
    # e_ref : (BT, de, Lt)  edge features; channels on sublanes, flattened
    #                       (i, j) edge index on lanes.
    # m_ref : (BT, 1,  Lt)  flattened e_mask1 * e_mask2 (0/1 floats).
    # w_ref : (4*de, dy)    transposed Linear weight (shared).
    # b_ref : (1, dy)       Linear bias (shared).
    # o_ref : (1, BT, dy)   output rows for this batch tile.
    # s_*   : VMEM accumulators, persistent across the L-chunk grid axis.
    l = pl.program_id(1)
    n_l = pl.num_programs(1)

    e = e_ref[...]                       # (BT, de, Lt) f32
    mask = m_ref[...]                    # (BT, 1,  Lt) f32 in {0, 1}
    big = 100000.0 * (1.0 - mask)        # computed once, reused for min & max

    em = e * mask
    p_sum = jnp.sum(e, axis=2)           # unmasked sum (matches the reference)
    p_summ = jnp.sum(em, axis=2)         # masked sum        (for variance)
    p_sum2m = jnp.sum(e * em, axis=2)    # masked sum of E^2 (for variance)
    p_min = jnp.min(e + big, axis=2)     # (BT, de)
    p_max = jnp.max(e - big, axis=2)     # (BT, de)
    p_cnt = jnp.sum(mask, axis=2)        # (BT, 1)

    @pl.when(l == 0)
    def _init():
        s_sum[...] = p_sum
        s_summ[...] = p_summ
        s_sum2m[...] = p_sum2m
        s_min[...] = p_min
        s_max[...] = p_max
        s_cnt[...] = p_cnt

    @pl.when(l > 0)
    def _accumulate():
        s_sum[...] += p_sum
        s_summ[...] += p_summ
        s_sum2m[...] += p_sum2m
        s_min[...] = jnp.minimum(s_min[...], p_min)
        s_max[...] = jnp.maximum(s_max[...], p_max)
        s_cnt[...] += p_cnt

    @pl.when(l == n_l - 1)
    def _finalize():
        cnt = s_cnt[...]                 # (BT, 1)
        inv = 1.0 / cnt                  # exact; approx EUP recip is too coarse
        mean = s_sum[...] * inv          # (BT, de)
        # One-pass variance identity:
        #   sum((E-mean)^2 * m) = sum(E^2 m) - 2*mean*sum(E m) + mean^2*count
        var = (s_sum2m[...] - 2.0 * mean * s_summ[...]
               + mean * mean * cnt) * inv
        # z = hstack([mean, min, max, var]); single batched MXU matmul.
        z = jnp.concatenate([mean, s_min[...], s_max[...], var], axis=-1)
        out = (jnp.dot(z, w_ref[...], preferred_element_type=jnp.float32)
               + b_ref[...])
        o_ref[0] = out.astype(o_ref.dtype)       # (BT, dy) lane-dense store


def _choose_tiling(bs, de, L, e_block_budget_bytes=4 << 20):
    """Pick (batch_tile, l_tile): biggest blocks that fit a modest VMEM budget,
    while keeping >= 2 batch grid steps when possible (v7x has 2 TCs)."""
    de_p = ((de + 7) // 8) * 8

    def e_block_bytes(bt, lt):
        return bt * de_p * (((lt + 127) // 128) * 128) * 4

    # Candidate chunk sizes along the flattened n*n axis: full L first
    # (no reduction axis), then multiples of 128 that divide L, largest first.
    l_cands = [L] + sorted(
        (lt for lt in range(128, L, 128) if L % lt == 0), reverse=True)
    for lt in l_cands:
        fitting = [d for d in range(1, min(bs, 64) + 1)
                   if bs % d == 0 and e_block_bytes(d, lt) <= e_block_budget_bytes]
        if not fitting:
            continue
        multi = [d for d in fitting if bs // d >= 2]
        return (max(multi) if multi else max(fitting)), lt
    small = [lt for lt in range(128, L, 128) if L % lt == 0]
    return 1, (min(small) if small else L)


def etoy_forward(E, e_mask1, e_mask2, weight, bias, *, b_tile=None, l_tile=None):
    """E: (bs, n, n, de); e_mask1: (bs, n, 1, 1); e_mask2: (bs, 1, n, 1);
       weight: (dy, 4*de); bias: (dy,).  Returns (bs, dy) f32."""
    bs, n, _, de = E.shape
    dy = weight.shape[0]
    L = n * n

    bt_auto, lt_auto = _choose_tiling(bs, de, L)
    b_tile = bt_auto if b_tile is None else b_tile
    l_tile = lt_auto if l_tile is None else l_tile
    assert bs % b_tile == 0, "batch tile must divide bs"
    assert L % l_tile == 0, "l_tile must divide n*n"
    assert l_tile == L or l_tile % 128 == 0, "partial l_tile must be lane-aligned"
    n_b = bs // b_tile
    n_l = L // l_tile

    # Lane-dense layout: (bs, n, n, de) -> (bs, de, n*n); reduction axis on lanes.
    # TODO(synk): if the producer can hand E over as bf16, keep bf16 here and
    # upcast inside the kernel to halve HBM traffic (the kernel is BW-bound).
    e_flat = jnp.transpose(E.astype(jnp.float32), (0, 3, 1, 2)).reshape(bs, de, L)
    m1v = e_mask1.astype(jnp.float32).reshape(bs, n)
    m2v = e_mask2.astype(jnp.float32).reshape(bs, n)
    mask_flat = (m1v[:, :, None] * m2v[:, None, :]).reshape(bs, 1, L)
    w_t = weight.T.astype(jnp.float32)                  # (4*de, dy)
    b2 = bias.reshape(1, dy).astype(jnp.float32)        # (1, dy)

    # Explicit VMEM limit (v7x: 64 MiB physical, 32 MiB default scoped limit).
    def _pad(x, m):
        return ((x + m - 1) // m) * m
    e_blk = b_tile * _pad(de, 8) * _pad(l_tile, 128) * 4
    m_blk = b_tile * 8 * _pad(l_tile, 128) * 4
    w_blk = _pad(4 * de, 8) * _pad(dy, 128) * 4
    bias_blk = 8 * _pad(dy, 128) * 4
    o_blk = _pad(b_tile, 8) * _pad(dy, 128) * 4
    scratch_bytes = 6 * _pad(b_tile, 8) * 128 * 4
    vmem_limit = 2 * (e_blk + m_blk + w_blk + bias_blk + o_blk) + scratch_bytes
    vmem_limit = min(max(vmem_limit + (2 << 20), 8 << 20), 64 << 20)

    out = pl.pallas_call(
        _etoy_kernel,
        out_shape=jax.ShapeDtypeStruct((n_b, b_tile, dy), jnp.float32),
        grid_spec=pltpu.PrefetchScalarGridSpec(
            num_scalar_prefetch=0,
            grid=(n_b, n_l),
            in_specs=[
                pl.BlockSpec((b_tile, de, l_tile), lambda b, l: (b, 0, l)),
                pl.BlockSpec((b_tile, 1, l_tile), lambda b, l: (b, 0, l)),
                pl.BlockSpec((4 * de, dy), lambda b, l: (0, 0)),
                pl.BlockSpec((1, dy), lambda b, l: (0, 0)),
            ],
            out_specs=pl.BlockSpec((1, b_tile, dy), lambda b, l: (b, 0, 0)),
            scratch_shapes=[
                pltpu.VMEM((b_tile, de), jnp.float32),   # sum(E)
                pltpu.VMEM((b_tile, de), jnp.float32),   # sum(E * m)
                pltpu.VMEM((b_tile, de), jnp.float32),   # sum(E^2 * m)
                pltpu.VMEM((b_tile, de), jnp.float32),   # running min
                pltpu.VMEM((b_tile, de), jnp.float32),   # running max
                pltpu.VMEM((b_tile, 1), jnp.float32),    # count
            ],
        ),
        compiler_params=pltpu.CompilerParams(
            dimension_semantics=("parallel", "arbitrary"),
            vmem_limit_bytes=vmem_limit),
    )(e_flat, mask_flat, w_t, b2)
    return out.reshape(bs, dy)


def etoy_reference(E, e_mask1, e_mask2, weight, bias):
    """Pure-JAX transcription of the PyTorch forward, for verification."""
    de = E.shape[-1]
    mask = jnp.broadcast_to(e_mask1 * e_mask2, E.shape[:-1] + (de,))
    float_imask = 1.0 - mask
    divide = jnp.sum(mask, axis=(1, 2))
    m = jnp.sum(E, axis=(1, 2)) / divide
    mi = jnp.min(jnp.min(E + 100000.0 * float_imask, axis=2), axis=1)
    ma = jnp.max(jnp.max(E - 100000.0 * float_imask, axis=2), axis=1)
    std = jnp.sum((E - m[:, None, None, :]) ** 2 * mask, axis=(1, 2)) / divide
    z = jnp.concatenate([m, mi, ma, std], axis=-1)
    return z @ weight.T + bias


def _run_case(key, bs, n, de, dy, keep_counts, **tiling_kwargs):
    k_e, k_w, k_b = jax.random.split(key, 3)
    E = jax.random.normal(k_e, (bs, n, n, de), dtype=jnp.float32)
    node_mask = (jnp.arange(n)[None, :]
                 < jnp.asarray(keep_counts)[:, None]).astype(jnp.float32)
    e_mask1 = node_mask[:, :, None, None]
    e_mask2 = node_mask[:, None, :, None]
    weight = 0.1 * jax.random.normal(k_w, (dy, 4 * de), dtype=jnp.float32)
    bias = 0.1 * jax.random.normal(k_b, (dy,), dtype=jnp.float32)

    out = jax.block_until_ready(
        etoy_forward(E, e_mask1, e_mask2, weight, bias, **tiling_kwargs))
    ref = etoy_reference(E, e_mask1, e_mask2, weight, bias)
    assert out.shape == (bs, dy)
    assert jnp.allclose(out, ref, rtol=1e-5, atol=1e-5), (
        f"max abs err = {jnp.max(jnp.abs(out - ref))}")


if __name__ == "__main__":
    key = jax.random.PRNGKey(0)
    k0, k1, k2 = jax.random.split(key, 3)

    # Primary toy case (matches the module's expected small shapes).
    _run_case(k0, bs=2, n=8, de=8, dy=16, keep_counts=[8, 6])

    # Batch-tiled case (auto tiling picks B_TILE=2 -> two megacore-parallel steps).
    _run_case(k1, bs=4, n=16, de=8, dy=16, keep_counts=[16, 12, 9, 16])

    # Force the chunked-reduction path (B_TILE=2, two 128-wide L chunks) to
    # exercise the accumulator init / accumulate / finalize pattern.
    _run_case(k2, bs=4, n=16, de=8, dy=16, keep_counts=[16, 13, 10, 7],
              b_tile=2, l_tile=128)

    print("KERNEL_OK")
</pallas_src>

<mosaic_0001>
module attributes {stable_mosaic.version = 11 : i64} {
  func.func @_etoy_kernel(%arg0: i32, %arg1: i32, %arg2: memref<1x8x64xf32, #tpu.memory_space<vmem>>, %arg3: memref<1x1x64xf32, #tpu.memory_space<vmem>>, %arg4: memref<32x16xf32, #tpu.memory_space<vmem>>, %arg5: memref<1x16xf32, #tpu.memory_space<vmem>>, %arg6: memref<1x1x16xf32, #tpu.memory_space<vmem>>, %arg7: memref<1x8xf32, #tpu.memory_space<vmem>>, %arg8: memref<1x8xf32, #tpu.memory_space<vmem>>, %arg9: memref<1x8xf32, #tpu.memory_space<vmem>>, %arg10: memref<1x8xf32, #tpu.memory_space<vmem>>, %arg11: memref<1x8xf32, #tpu.memory_space<vmem>>, %arg12: memref<1x1xf32, #tpu.memory_space<vmem>>) attributes {dimension_semantics = [#tpu.dimension_semantics<parallel>, #tpu.dimension_semantics<arbitrary>], iteration_bounds = array<i64: 2, 1>, scalar_prefetch = 0 : i64, scratch_operands = 6 : i64, tpu.core_type = #tpu.core_type<tc>, window_params = [{transform_indices = @transform_0, window_bounds = array<i64: 1, 8, 64>}, {transform_indices = @transform_1, window_bounds = array<i64: 1, 1, 64>}, {pipeline_mode = #tpu.pipeline_mode<synchronous>, transform_indices = @transform_2, window_bounds = array<i64: 32, 16>}, {pipeline_mode = #tpu.pipeline_mode<synchronous>, transform_indices = @transform_3, window_bounds = array<i64: 1, 16>}, {transform_indices = @transform_4, window_bounds = array<i64: 1, 1, 16>}]} {
    %c0 = arith.constant 0 : index
    %c0_0 = arith.constant 0 : index
    %c0_1 = arith.constant 0 : index
    %0 = vector.load %arg2[%c0, %c0_0, %c0_1] : memref<1x8x64xf32, #tpu.memory_space<vmem>>, vector<1x8x64xf32>
    %c0_2 = arith.constant 0 : index
    %c0_3 = arith.constant 0 : index
    %c0_4 = arith.constant 0 : index
    %1 = vector.load %arg3[%c0_2, %c0_3, %c0_4] : memref<1x1x64xf32, #tpu.memory_space<vmem>>, vector<1x1x64xf32>
    %cst = arith.constant 1.000000e+00 : f32
    %2 = vector.broadcast %cst : f32 to vector<1x1x64xf32>
    %3 = arith.subf %2, %1 : vector<1x1x64xf32>
    %cst_5 = arith.constant 1.000000e+05 : f32
    %4 = vector.broadcast %cst_5 : f32 to vector<1x1x64xf32>
    %5 = arith.mulf %4, %3 : vector<1x1x64xf32>
    %6 = vector.broadcast %1 : vector<1x1x64xf32> to vector<1x8x64xf32>
    %7 = arith.mulf %0, %6 : vector<1x8x64xf32>
    %cst_6 = arith.constant dense<0.000000e+00> : vector<1x8xf32>
    %8 = vector.multi_reduction <add>, %0, %cst_6 [2] : vector<1x8x64xf32> to vector<1x8xf32>
    %cst_7 = arith.constant dense<0.000000e+00> : vector<1x8xf32>
    %9 = vector.multi_reduction <add>, %7, %cst_7 [2] : vector<1x8x64xf32> to vector<1x8xf32>
    %10 = arith.mulf %0, %7 : vector<1x8x64xf32>
    %cst_8 = arith.constant dense<0.000000e+00> : vector<1x8xf32>
    %11 = vector.multi_reduction <add>, %10, %cst_8 [2] : vector<1x8x64xf32> to vector<1x8xf32>
    %12 = vector.broadcast %5 : vector<1x1x64xf32> to vector<1x8x64xf32>
    %13 = arith.addf %0, %12 : vector<1x8x64xf32>
    %cst_9 = arith.constant dense<0x7F800000> : vector<1x8xf32>
    %14 = vector.multi_reduction <minimumf>, %13, %cst_9 [2] : vector<1x8x64xf32> to vector<1x8xf32>
    %15 = vector.broadcast %5 : vector<1x1x64xf32> to vector<1x8x64xf32>
    %16 = arith.subf %0, %15 : vector<1x8x64xf32>
    %cst_10 = arith.constant dense<0xFF800000> : vector<1x8xf32>
    %17 = vector.multi_reduction <maximumf>, %16, %cst_10 [2] : vector<1x8x64xf32> to vector<1x8xf32>
    %cst_11 = arith.constant dense<0.000000e+00> : vector<1x1xf32>
    %18 = vector.multi_reduction <add>, %1, %cst_11 [2] : vector<1x1x64xf32> to vector<1x1xf32>
    %c0_i32 = arith.constant 0 : i32
    %19 = arith.cmpi eq, %arg1, %c0_i32 : i32
    %20 = arith.extui %19 : i1 to i32
    %c0_i32_12 = arith.constant 0 : i32
    %21 = arith.cmpi ne, %20, %c0_i32_12 : i32
    scf.if %21 {
      %c0_17 = arith.constant 0 : index
      %c0_18 = arith.constant 0 : index
      %28 = vector.load %arg7[%c0_17, %c0_18] : memref<1x8xf32, #tpu.memory_space<vmem>>, vector<1x8xf32>
      tpu.vector_store %arg7[%c0_17, %c0_18], %8 {strides = array<i32>} : memref<1x8xf32, #tpu.memory_space<vmem>>, vector<1x8xf32>,
      %c0_19 = arith.constant 0 : index
      %c0_20 = arith.constant 0 : index
      %29 = vector.load %arg8[%c0_19, %c0_20] : memref<1x8xf32, #tpu.memory_space<vmem>>, vector<1x8xf32>
      tpu.vector_store %arg8[%c0_19, %c0_20], %9 {strides = array<i32>} : memref<1x8xf32, #tpu.memory_space<vmem>>, vector<1x8xf32>,
      %c0_21 = arith.constant 0 : index
      %c0_22 = arith.constant 0 : index
      %30 = vector.load %arg9[%c0_21, %c0_22] : memref<1x8xf32, #tpu.memory_space<vmem>>, vector<1x8xf32>
      tpu.vector_store %arg9[%c0_21, %c0_22], %11 {strides = array<i32>} : memref<1x8xf32, #tpu.memory_space<vmem>>, vector<1x8xf32>,
      %c0_23 = arith.constant 0 : index
      %c0_24 = arith.constant 0 : index
      %31 = vector.load %arg10[%c0_23, %c0_24] : memref<1x8xf32, #tpu.memory_space<vmem>>, vector<1x8xf32>
      tpu.vector_store %arg10[%c0_23, %c0_24], %14 {strides = array<i32>} : memref<1x8xf32, #tpu.memory_space<vmem>>, vector<1x8xf32>,
      %c0_25 = arith.constant 0 : index
      %c0_26 = arith.constant 0 : index
      %32 = vector.load %arg11[%c0_25, %c0_26] : memref<1x8xf32, #tpu.memory_space<vmem>>, vector<1x8xf32>
      tpu.vector_store %arg11[%c0_25, %c0_26], %17 {strides = array<i32>} : memref<1x8xf32, #tpu.memory_space<vmem>>, vector<1x8xf32>,
      %c0_27 = arith.constant 0 : index
      %c0_28 = arith.constant 0 : index
      %33 = vector.load %arg12[%c0_27, %c0_28] : memref<1x1xf32, #tpu.memory_space<vmem>>, vector<1x1xf32>
      tpu.vector_store %arg12[%c0_27, %c0_28], %18 {strides = array<i32>} : memref<1x1xf32, #tpu.memory_space<vmem>>, vector<1x1xf32>,
    } else {
    }
    %c0_i32_13 = arith.constant 0 : i32
    %22 = arith.cmpi sgt, %arg1, %c0_i32_13 : i32
    %23 = arith.extui %22 : i1 to i32
    %c0_i32_14 = arith.constant 0 : i32
    %24 = arith.cmpi ne, %23, %c0_i32_14 : i32
    scf.if %24 {
      %c0_17 = arith.constant 0 : index
      %c0_18 = arith.constant 0 : index
      %28 = vector.load %arg7[%c0_17, %c0_18] : memref<1x8xf32, #tpu.memory_space<vmem>>, vector<1x8xf32>
      %29 = arith.addf %28, %8 : vector<1x8xf32>
      %c0_19 = arith.constant 0 : index
      %c0_20 = arith.constant 0 : index
      %30 = vector.load %arg7[%c0_19, %c0_20] : memref<1x8xf32, #tpu.memory_space<vmem>>, vector<1x8xf32>
      tpu.vector_store %arg7[%c0_19, %c0_20], %29 {strides = array<i32>} : memref<1x8xf32, #tpu.memory_space<vmem>>, vector<1x8xf32>,
      %c0_21 = arith.constant 0 : index
      %c0_22 = arith.constant 0 : index
      %31 = vector.load %arg8[%c0_21, %c0_22] : memref<1x8xf32, #tpu.memory_space<vmem>>, vector<1x8xf32>
      %32 = arith.addf %31, %9 : vector<1x8xf32>
      %c0_23 = arith.constant 0 : index
      %c0_24 = arith.constant 0 : index
      %33 = vector.load %arg8[%c0_23, %c0_24] : memref<1x8xf32, #tpu.memory_space<vmem>>, vector<1x8xf32>
      tpu.vector_store %arg8[%c0_23, %c0_24], %32 {strides = array<i32>} : memref<1x8xf32, #tpu.memory_space<vmem>>, vector<1x8xf32>,
      %c0_25 = arith.constant 0 : index
      %c0_26 = arith.constant 0 : index
      %34 = vector.load %arg9[%c0_25, %c0_26] : memref<1x8xf32, #tpu.memory_space<vmem>>, vector<1x8xf32>
      %35 = arith.addf %34, %11 : vector<1x8xf32>
      %c0_27 = arith.constant 0 : index
      %c0_28 = arith.constant 0 : index
      %36 = vector.load %arg9[%c0_27, %c0_28] : memref<1x8xf32, #tpu.memory_space<vmem>>, vector<1x8xf32>
      tpu.vector_store %arg9[%c0_27, %c0_28], %35 {strides = array<i32>} : memref<1x8xf32, #tpu.memory_space<vmem>>, vector<1x8xf32>,
      %c0_29 = arith.constant 0 : index
      %c0_30 = arith.constant 0 : index
      %37 = vector.load %arg10[%c0_29, %c0_30] : memref<1x8xf32, #tpu.memory_space<vmem>>, vector<1x8xf32>
      %38 = arith.minimumf %37, %14 : vector<1x8xf32>
      %c0_31 = arith.constant 0 : index
      %c0_32 = arith.constant 0 : index
      %39 = vector.load %arg10[%c0_31, %c0_32] : memref<1x8xf32, #tpu.memory_space<vmem>>, vector<1x8xf32>
      tpu.vector_store %arg10[%c0_31, %c0_32], %38 {strides = array<i32>} : memref<1x8xf32, #tpu.memory_space<vmem>>, vector<1x8xf32>,
      %c0_33 = arith.constant 0 : index
      %c0_34 = arith.constant 0 : index
      %40 = vector.load %arg11[%c0_33, %c0_34] : memref<1x8xf32, #tpu.memory_space<vmem>>, vector<1x8xf32>
      %41 = arith.maximumf %40, %17 : vector<1x8xf32>
      %c0_35 = arith.constant 0 : index
      %c0_36 = arith.constant 0 : index
      %42 = vector.load %arg11[%c0_35, %c0_36] : memref<1x8xf32, #tpu.memory_space<vmem>>, vector<1x8xf32>
      tpu.vector_store %arg11[%c0_35, %c0_36], %41 {strides = array<i32>} : memref<1x8xf32, #tpu.memory_space<vmem>>, vector<1x8xf32>,
      %c0_37 = arith.constant 0 : index
      %c0_38 = arith.constant 0 : index
      %43 = vector.load %arg12[%c0_37, %c0_38] : memref<1x1xf32, #tpu.memory_space<vmem>>, vector<1x1xf32>
      %44 = arith.addf %43, %18 : vector<1x1xf32>
      %c0_39 = arith.constant 0 : index
      %c0_40 = arith.constant 0 : index
      %45 = vector.load %arg12[%c0_39, %c0_40] : memref<1x1xf32, #tpu.memory_space<vmem>>, vector<1x1xf32>
      tpu.vector_store %arg12[%c0_39, %c0_40], %44 {strides = array<i32>} : memref<1x1xf32, #tpu.memory_space<vmem>>, vector<1x1xf32>,
    } else {
    }
    %c0_i32_15 = arith.constant 0 : i32
    %25 = arith.cmpi eq, %arg1, %c0_i32_15 : i32
    %26 = arith.extui %25 : i1 to i32
    %c0_i32_16 = arith.constant 0 : i32
    %27 = arith.cmpi ne, %26, %c0_i32_16 : i32
    scf.if %27 {
      %c0_17 = arith.constant 0 : index
      %c0_18 = arith.constant 0 : index
      %28 = vector.load %arg12[%c0_17, %c0_18] : memref<1x1xf32, #tpu.memory_space<vmem>>, vector<1x1xf32>
      %cst_19 = arith.constant 1.000000e+00 : f32
      %29 = vector.broadcast %cst_19 : f32 to vector<1x1xf32>
      %30 = arith.divf %29, %28 : vector<1x1xf32>
      %c0_20 = arith.constant 0 : index
      %c0_21 = arith.constant 0 : index
      %31 = vector.load %arg7[%c0_20, %c0_21] : memref<1x8xf32, #tpu.memory_space<vmem>>, vector<1x8xf32>
      %32 = vector.broadcast %30 : vector<1x1xf32> to vector<1x8xf32>
      %33 = arith.mulf %31, %32 : vector<1x8xf32>
      %c0_22 = arith.constant 0 : index
      %c0_23 = arith.constant 0 : index
      %34 = vector.load %arg9[%c0_22, %c0_23] : memref<1x8xf32, #tpu.memory_space<vmem>>, vector<1x8xf32>
      %cst_24 = arith.constant 2.000000e+00 : f32
      %35 = vector.broadcast %cst_24 : f32 to vector<1x8xf32>
      %36 = arith.mulf %35, %33 : vector<1x8xf32>
      %c0_25 = arith.constant 0 : index
      %c0_26 = arith.constant 0 : index
      %37 = vector.load %arg8[%c0_25, %c0_26] : memref<1x8xf32, #tpu.memory_space<vmem>>, vector<1x8xf32>
      %38 = arith.mulf %36, %37 : vector<1x8xf32>
      %39 = arith.subf %34, %38 : vector<1x8xf32>
      %40 = arith.mulf %33, %33 : vector<1x8xf32>
      %41 = vector.broadcast %28 : vector<1x1xf32> to vector<1x8xf32>
      %42 = arith.mulf %40, %41 : vector<1x8xf32>
      %43 = arith.addf %39, %42 : vector<1x8xf32>
      %44 = vector.broadcast %30 : vector<1x1xf32> to vector<1x8xf32>
      %45 = arith.mulf %43, %44 : vector<1x8xf32>
      %c0_27 = arith.constant 0 : index
      %c0_28 = arith.constant 0 : index
      %46 = vector.load %arg10[%c0_27, %c0_28] : memref<1x8xf32, #tpu.memory_space<vmem>>, vector<1x8xf32>
      %c0_29 = arith.constant 0 : index
      %c0_30 = arith.constant 0 : index
      %47 = vector.load %arg11[%c0_29, %c0_30] : memref<1x8xf32, #tpu.memory_space<vmem>>, vector<1x8xf32>
      %48 = tpu.concatenate %33, %46, %47, %45 in 1 : vector<1x8xf32>, vector<1x8xf32>, vector<1x8xf32>, vector<1x8xf32> -> vector<1x32xf32>
      %c0_31 = arith.constant 0 : index
      %c0_32 = arith.constant 0 : index
      %49 = vector.load %arg4[%c0_31, %c0_32] : memref<32x16xf32, #tpu.memory_space<vmem>>, vector<32x16xf32>
      %cst_33 = arith.constant dense<0.000000e+00> : vector<1x16xf32>
      %50 = tpu.matmul %48, %49, %cst_33 {dimension_numbers = #tpu.dot_dimension_numbers<[1], [0], [0], [1], [0, 0, 1, 1], [], []>} : vector<1x32xf32>, vector<32x16xf32>, vector<1x16xf32> -> vector<1x16xf32>
      %c0_34 = arith.constant 0 : index
      %c0_35 = arith.constant 0 : index
      %51 = vector.load %arg5[%c0_34, %c0_35] : memref<1x16xf32, #tpu.memory_space<vmem>>, vector<1x16xf32>
      %52 = arith.addf %50, %51 : vector<1x16xf32>
      %c0_36 = arith.constant 0 : index
      %c0_37 = arith.constant 0 : index
      %c0_38 = arith.constant 0 : index
      %53 = vector.load %arg6[%c0_36, %c0_37, %c0_38] : memref<1x1x16xf32, #tpu.memory_space<vmem>>, vector<1x1x16xf32>
      %54 = vector.shape_cast %53 : vector<1x1x16xf32> to vector<1x16xf32>
      %55 = vector.shape_cast %52 : vector<1x16xf32> to vector<1x1x16xf32>
      tpu.vector_store %arg6[%c0_36, %c0_37, %c0_38], %55 {strides = array<i32>} : memref<1x1x16xf32, #tpu.memory_space<vmem>>, vector<1x1x16xf32>,
    } else {
    }
    return
  }
  func.func @transform_0(%arg0: i32, %arg1: i32) -> (i32, i32, i32) {
    %c0_i32 = arith.constant 0 : i32
    %c0_i32_0 = arith.constant 0 : i32
    return %arg0, %c0_i32, %arg1 : i32, i32, i32
  }
  func.func @transform_1(%arg0: i32, %arg1: i32) -> (i32, i32, i32) {
    %c0_i32 = arith.constant 0 : i32
    %c0_i32_0 = arith.constant 0 : i32
    return %arg0, %c0_i32, %arg1 : i32, i32, i32
  }
  func.func @transform_2(%arg0: i32, %arg1: i32) -> (i32, i32) {
    %c0_i32 = arith.constant 0 : i32
    %c0_i32_0 = arith.constant 0 : i32
    %c0_i32_1 = arith.constant 0 : i32
    return %c0_i32, %c0_i32_0 : i32, i32
  }
  func.func @transform_3(%arg0: i32, %arg1: i32) -> (i32, i32) {
    %c0_i32 = arith.constant 0 : i32
    %c0_i32_0 = arith.constant 0 : i32
    %c0_i32_1 = arith.constant 0 : i32
    return %c0_i32, %c0_i32_0 : i32, i32
  }
  func.func @transform_4(%arg0: i32, %arg1: i32) -> (i32, i32, i32) {
    %c0_i32 = arith.constant 0 : i32
    %c0_i32_0 = arith.constant 0 : i32
    %c0_i32_1 = arith.constant 0 : i32
    return %arg0, %c0_i32, %c0_i32_0 : i32, i32, i32
  }
}

</mosaic_0001>

<llo_original>
// kernel: tpu_custom_call.1
$region0: #{tpu_custom_call.1}
  #allocation0 [shape = 'u32[]', space=smem, size = 0x4, offset = 0x4, fixed_abs, tag = 'smem constant byte address 0x4 - core index']
  #allocation1 [shape = 'u32[144,128]{1,0:T(1,128)}', space=vmem, size = 0x12000, scoped, tag = 'internal scratch']
  #allocation2 [shape = 'f32[1,8]{1,0:T(1,128)}', space=vmem, size = 0x200, scoped, tag = 'scratch operand']
  #allocation3 [shape = 'f32[1,8]{1,0:T(1,128)}', space=vmem, size = 0x200, scoped, tag = 'scratch operand']
  #allocation4 [shape = 'f32[1,8]{1,0:T(1,128)}', space=vmem, size = 0x200, scoped, tag = 'scratch operand']
  #allocation5 [shape = 'f32[1,8]{1,0:T(1,128)}', space=vmem, size = 0x200, scoped, tag = 'scratch operand']
  #allocation6 [shape = 'f32[1,8]{1,0:T(1,128)}', space=vmem, size = 0x200, scoped, tag = 'scratch operand']
  #allocation7 [shape = 'f32[1,1]{1,0:T(1,128)}', space=vmem, size = 0x200, scoped, tag = 'scratch operand']
  %s0 = inlined_call_operand.vmem [shape: f32[2,8,64], index: 0, kind: input, shape index: {}]
  %s1 = inlined_call_operand.vmem [shape: f32[2,1,64], index: 1, kind: input, shape index: {}]
  %s2 = inlined_call_operand.vmem [shape: f32[32,16], index: 2, kind: input, shape index: {}]
  %s3 = inlined_call_operand.vmem [shape: f32[1,16], index: 3, kind: input, shape index: {}]
  %s4 = inlined_call_operand.hbm [shape: f32[2,1,16], index: 4, kind: output, shape index: {}]
  %s5 = sld [smem:[#allocation0]]
  $region61: #{tpu_custom_call.1} parent=0
    _
  %s7 = ssub.s32 1, %s5
  %s8 = scalar_select 0, %s7, %s5
  $region1: #{tpu_custom_call.1} parent=0
    #allocation8 [shape = 'u8[1024]{0}', space=vmem, size = 0x400, scoped, tag = 'output window, operand 0']
    #allocation9 [shape = 's32[2]{0}', space=sflag, size = 0x8, scoped, tag = 'scoped memory for tpu_custom_call.1']
    %9 = vsyncpa [#allocation9], 0
    %s10 = scalar_lea.sflag [#allocation9], 1
    %11 = vsyncpa %s10, 0
    loop: start=0, step=1, limit=4
    $region2: #{tpu_custom_call.1} parent=1 // loop_pre_header
      _
    $region3: #{tpu_custom_call.1} parent=1 // loop_header
      %s13 = sphi 0, %s17
      %p14 = scmp.ge.s32.totalorder %s13, 4
      %s20 = sphi 0, %s32
      %s21 = sphi 0, %s28
      %s22 = sphi 0, %s20
      %s23 = sphi 0, %s21
      %s24 = sphi 0, %s22
      %s25 = sphi 0, %s23
      %s37 = sphi 0, %s39
      %s40 = sphi 0, %s37
      %s41 = sphi 0, %s40
      %s57 = sphi 0, %s41
      %s65 = sphi 0, %s67
      %s68 = sphi 0, %s65
      %s69 = sphi 0, %s68
      %s85 = sphi 0, %s69
      %s89 = sphi 0, %s89
      %s91 = sphi 0, %s89
      %s92 = sphi 0, %s91
      %s106 = sphi 0, %s92
      %s110 = sphi 0, %s110
      %s112 = sphi 0, %s110
      %s113 = sphi 0, %s112
      %s127 = sphi 0, %s113
      %s133 = sphi 0, %s135
      %s136 = sphi 0, %s133
      %s137 = sphi 0, %s136
      %s153 = sphi 0, %s137
    $region4: #{tpu_custom_call.1} parent=1 // loop_header_branch
      %16 = sbr.rel (%p14) target = $region8
    $region5: #{tpu_custom_call.1} parent=1 // loop_body
      %s18 = ssub.s32 %s13, 1
      %s19 = ssub.s32 %s13, 2
      %s26 = sadd.s32 1, %s21
      %p27 = scmp.ge.s32.totalorder %s26, 1
      %s28 = scalar_select %p27, 0, %s26
      %s29 = sadd.s32 1, %s20
      %s30 = scalar_select %p27, %s29, %s20
      %p31 = scmp.ge.s32.totalorder %s30, 2
      %s32 = scalar_select %p31, 0, %s30
      %s33 = ssub.s32 %s20, %s32
      %s34 = ssub.s32 %s21, %s28
      %s35 = sor.u32 %s33, %s34
      %p36 = scmp.eq.s32.totalorder %s35, 0
      %s38 = sadd.s32 %s37, 1
      %s39 = scalar_select %p36, %s37, %s38
      %p42 = pneg %p36
      %p43 = scmp.eq.s32.totalorder %s13, 1
      %p44 = por %p42, %p43
      %p45 = scmp.ne.s32.totalorder %s37, %s40
      %p46 = scmp.eq.s32.totalorder %s13, 0
      %p47 = por %p45, %p46
      %p48 = scmp.ne.s32.totalorder %s37, %s40
      %p49 = scmp.eq.s32.totalorder %s18, 1
      %p50 = por %p48, %p49
      %p51 = scmp.ne.s32.totalorder %s40, %s41
      %p52 = scmp.eq.s32.totalorder %s18, 0
      %p53 = por %p51, %p52
      %p54 = scmp.ne.s32.totalorder %s40, %s41
      %p55 = scmp.eq.s32.totalorder %s19, 1
      %p56 = por %p54, %p55
      %p58 = scmp.ne.s32.totalorder %s41, %s57
      %p59 = scmp.eq.s32.totalorder %s19, 0
      %p60 = por %p58, %p59
      %s61 = ssub.s32 %s20, %s32
      %s62 = ssub.s32 %s21, %s28
      %s63 = sor.u32 %s61, %s62
      %p64 = scmp.eq.s32.totalorder %s63, 0
      %s66 = sadd.s32 %s65, 1
      %s67 = scalar_select %p64, %s65, %s66
      %p70 = pneg %p64
      %p71 = scmp.eq.s32.totalorder %s13, 1
      %p72 = por %p70, %p71
      %p73 = scmp.ne.s32.totalorder %s65, %s68
      %p74 = scmp.eq.s32.totalorder %s13, 0
      %p75 = por %p73, %p74
      %p76 = scmp.ne.s32.totalorder %s65, %s68
      %p77 = scmp.eq.s32.totalorder %s18, 1
      %p78 = por %p76, %p77
      %p79 = scmp.ne.s32.totalorder %s68, %s69
      %p80 = scmp.eq.s32.totalorder %s18, 0
      %p81 = por %p79, %p80
      %p82 = scmp.ne.s32.totalorder %s68, %s69
      %p83 = scmp.eq.s32.totalorder %s19, 1
      %p84 = por %p82, %p83
      %p86 = scmp.ne.s32.totalorder %s69, %s85
      %p87 = scmp.eq.s32.totalorder %s19, 0
      %p88 = por %p86, %p87
      %s90 = sadd.s32 %s89, 1
      %p93 = scmp.eq.s32.totalorder %s13, 1
      %p94 = scmp.ne.s32.totalorder %s89, %s91
      %p95 = scmp.eq.s32.totalorder %s13, 0
      %p96 = por %p94, %p95
      %p97 = scmp.ne.s32.totalorder %s89, %s91
      %p98 = scmp.eq.s32.totalorder %s18, 1
      %p99 = por %p97, %p98
      %p100 = scmp.ne.s32.totalorder %s91, %s92
      %p101 = scmp.eq.s32.totalorder %s18, 0
      %p102 = por %p100, %p101
      %p103 = scmp.ne.s32.totalorder %s91, %s92
      %p104 = scmp.eq.s32.totalorder %s19, 1
      %p105 = por %p103, %p104
      %p107 = scmp.ne.s32.totalorder %s92, %s106
      %p108 = scmp.eq.s32.totalorder %s19, 0
      %p109 = por %p107, %p108
      %s111 = sadd.s32 %s110, 1
      %p114 = scmp.eq.s32.totalorder %s13, 1
      %p115 = scmp.ne.s32.totalorder %s110, %s112
      %p116 = scmp.eq.s32.totalorder %s13, 0
      %p117 = por %p115, %p116
      %p118 = scmp.ne.s32.totalorder %s110, %s112
      %p119 = scmp.eq.s32.totalorder %s18, 1
      %p120 = por %p118, %p119
      %p121 = scmp.ne.s32.totalorder %s112, %s113
      %p122 = scmp.eq.s32.totalorder %s18, 0
      %p123 = por %p121, %p122
      %p124 = scmp.ne.s32.totalorder %s112, %s113
      %p125 = scmp.eq.s32.totalorder %s19, 1
      %p126 = por %p124, %p125
      %p128 = scmp.ne.s32.totalorder %s113, %s127
      %p129 = scmp.eq.s32.totalorder %s19, 0
      %p130 = por %p128, %p129
      %s131 = ssub.s32 %s20, %s32
      %p132 = scmp.eq.s32.totalorder %s131, 0
      %s134 = sadd.s32 %s133, 1
      %s135 = scalar_select %p132, %s133, %s134
      %p138 = pneg %p132
      %p139 = scmp.eq.s32.totalorder %s13, 1
      %p140 = por %p138, %p139
      %p141 = scmp.ne.s32.totalorder %s133, %s136
      %p142 = scmp.eq.s32.totalorder %s13, 0
      %p143 = por %p141, %p142
      %p144 = scmp.ne.s32.totalorder %s133, %s136
      %p145 = scmp.eq.s32.totalorder %s18, 1
      %p146 = por %p144, %p145
      %p147 = scmp.ne.s32.totalorder %s136, %s137
      %p148 = scmp.eq.s32.totalorder %s18, 0
      %p149 = por %p147, %p148
      %p150 = scmp.ne.s32.totalorder %s136, %s137
      %p151 = scmp.eq.s32.totalorder %s19, 1
      %p152 = por %p150, %p151
      %p154 = scmp.ne.s32.totalorder %s137, %s153
      %p155 = scmp.eq.s32.totalorder %s19, 0
      %p156 = por %p154, %p155
      %p157 = scmp.le.s32.totalorder 1, %s13
      %p158 = scmp.lt.s32.totalorder %s13, 3
      %p159 = pnand %p157, %p158
      %p160 = pneg %p159
      // Predicated region
      $region9: #{tpu_custom_call.1} parent=5 // pred_check
        _
      $region10: #{tpu_custom_call.1} parent=5 // pred_check_branch
        %162 = sbr.rel (%p159) target = $region12
      $region11: #{tpu_custom_call.1} parent=5 // pred_region
        %s163 = ssub.s32 %s13, 1
        // Predicated region
        $region13: #{tpu_custom_call.1} parent=11 // pred_check
          %p164 = pneg %p102
        $region14: #{tpu_custom_call.1} parent=11 // pred_check_branch
          %166 = sbr.rel (%p164) target = $region16
        $region15: #{tpu_custom_call.1} parent=11 // pred_region
          _
        $region16: #{tpu_custom_call.1} parent=11 // pred_fallthru
          _
        // Predicated region
        $region17: #{tpu_custom_call.1} parent=11 // pred_check
          %p167 = pneg %p123
        $region18: #{tpu_custom_call.1} parent=11 // pred_check_branch
          %169 = sbr.rel (%p167) target = $region20
        $region19: #{tpu_custom_call.1} parent=11 // pred_region
          _
        $region20: #{tpu_custom_call.1} parent=11 // pred_fallthru
          _
      $region12: #{tpu_custom_call.1} parent=5 // pred_fallthru
        _
      %p170 = scmp.lt.s32.totalorder %s13, 2
      // Predicated region
      $region21: #{tpu_custom_call.1} parent=5 // pred_check
        %p171 = pneg %p170
      $region22: #{tpu_custom_call.1} parent=5 // pred_check_branch
        %173 = sbr.rel (%p171) target = $region24
      $region23: #{tpu_custom_call.1} parent=5 // pred_region
        // Predicated region
        $region25: #{tpu_custom_call.1} parent=23 // pred_check
          %p174 = pneg %p47
        $region26: #{tpu_custom_call.1} parent=23 // pred_check_branch
          %176 = sbr.rel (%p174) target = $region28
        $region27: #{tpu_custom_call.1} parent=23 // pred_region
          %p177 = scmp.lt.s32.totalorder %s20, 1
          %s178 = scalar_select %p177, %s20, 1
          %p179 = scmp.lt.s32.totalorder %s21, 0
          %s180 = scalar_select %p179, %s21, 0
          %s181 = sadd.s32 %s180, %s178
          %s182 = smul.addr %s181, 8
          %s183 = scalar_lea.vmem %s0, %s182
        $region28: #{tpu_custom_call.1} parent=23 // pred_fallthru
          _
        // Predicated region
        $region29: #{tpu_custom_call.1} parent=23 // pred_check
          %p184 = pneg %p75
        $region30: #{tpu_custom_call.1} parent=23 // pred_check_branch
          %186 = sbr.rel (%p184) target = $region32
        $region31: #{tpu_custom_call.1} parent=23 // pred_region
          %p187 = scmp.lt.s32.totalorder %s20, 1
          %s188 = scalar_select %p187, %s20, 1
          %p189 = scmp.lt.s32.totalorder %s21, 0
          %s190 = scalar_select %p189, %s21, 0
          %s191 = sadd.s32 %s190, %s188
          %s192 = scalar_lea.vmem %s1, %s191
        $region32: #{tpu_custom_call.1} parent=23 // pred_fallthru
          _
      $region24: #{tpu_custom_call.1} parent=5 // pred_fallthru
        _
      %p193 = scmp.le.s32.totalorder 1, %s13
      %p194 = scmp.lt.s32.totalorder %s13, 3
      %p195 = pnand %p193, %p194
      %p196 = pneg %p195
      // Predicated region
      $region33: #{tpu_custom_call.1} parent=5 // pred_check
        _
      $region34: #{tpu_custom_call.1} parent=5 // pred_check_branch
        %198 = sbr.rel (%p195) target = $region36
      $region35: #{tpu_custom_call.1} parent=5 // pred_region
        %s199 = ssub.s32 %s13, 1
        %p200 = scmp.lt.s32.totalorder %s22, 1
        %s201 = scalar_select %p200, %s22, 1
        %p202 = scmp.lt.s32.totalorder %s23, 0
        %s203 = scalar_select %p202, %s23, 0
        %s204 = sadd.s32 %s203, %s201
        %s205 = smul.addr %s204, 8
        %s206 = scalar_lea.vmem %s0, %s205
        %p207 = pneg %p53
        %p208 = pneg %p50
        %p209 = scmp.lt.s32.totalorder %s22, 1
        %s210 = scalar_select %p209, %s22, 1
        %p211 = scmp.lt.s32.totalorder %s23, 0
        %s212 = scalar_select %p211, %s23, 0
        %s213 = sadd.s32 %s212, %s210
        %s214 = scalar_lea.vmem %s1, %s213
        %p215 = pneg %p81
        %p216 = pneg %p78
        %p217 = pneg %p102
        %p218 = pneg %p99
        %p219 = pneg %p123
        %p220 = pneg %p120
        %p221 = pneg %p149
        %p222 = pneg %p146
        %s223 = sand.u32 %s136, 1
        %s224 = scalar_lea.sflag [#allocation9], %s223
        %s225 = sand.u32 %s136, 1
        %s226 = scalar_lea.vmem [#allocation8], %s225
        %p227 = scmp.lt.s32.totalorder %s22, 1
        %s228 = scalar_select %p227, %s22, 1
        %p229 = scmp.lt.s32.totalorder %s23, 0
        %s230 = scalar_select %p229, %s23, 0
        %s231 = sadd.s32 %s230, %s228
        %s232 = smul.addr %s231, 8
        %s233 = scalar_lea.vmem %s0, %s232
        %p234 = scmp.lt.s32.totalorder %s22, 1
        %s235 = scalar_select %p234, %s22, 1
        %p236 = scmp.lt.s32.totalorder %s23, 0
        %s237 = scalar_select %p236, %s23, 0
        %s238 = sadd.s32 %s237, %s235
        %s239 = scalar_lea.vmem %s1, %s238
        %v240 = vld [vmem:[%s233] sm:$0xff]
        %v241 = vld [vmem:[%s239] sm:$0x1]
        %v242 = vsub.f32 1.0, %v241
        %v243 = vmul.f32 %v242, 100000.0
        %v245 = vlaneseq
        %v246 = vshrl.u32 %v245, 7
        %v247 = vsub.s32 0, %v246
        %v248 = vrot.slane %v241, %v247
        %v250 = vmul.f32 %v240, %v248
        %vm251 = vcmask 523264
        %v252 = vsel %vm251, %v240, 0.0
        %253 = vadd.xlane.f32.xlu0 %v252
        %v254 = vpop.xlane.xlu0 %253
        %v255 = vsel %vm251, %v250, 0.0
        %256 = vadd.xlane.f32.xlu0 %v255
        %v257 = vpop.xlane.xlu0 %256
        %v258 = vmul.f32 %v240, %v250
        %v259 = vsel %vm251, %v258, 0.0
        %260 = vadd.xlane.f32.xlu0 %v259
        %v261 = vpop.xlane.xlu0 %260
        %v263 = vlaneseq
        %v264 = vshrl.u32 %v263, 7
        %v265 = vsub.s32 0, %v264
        %v266 = vrot.slane %v243, %v265
        %v268 = vadd.f32 %v240, %v266
        %v269 = vsel %vm251, %v268, inf
        %270 = vmin.xlane.f32.xlu0 %v269
        %v271 = vpop.xlane.xlu0 %270
        %v272 = vsub.f32 %v240, %v266
        %v273 = vsel %vm251, %v272, -inf
        %274 = vmax.xlane.f32.xlu0 %v273
        %v275 = vpop.xlane.xlu0 %274
        %vm276 = vcmask 516096
        %v277 = vsel %vm276, %v241, 0.0
        %278 = vadd.xlane.f32.xlu0 %v277
        %v279 = vpop.xlane.xlu0 %278
        %p280 = scmp.eq.s32.totalorder %s23, 0
        // Predicated region
        $region37: #{tpu_custom_call.1} parent=35 // pred_check
          %p281 = pneg %p280
        $region38: #{tpu_custom_call.1} parent=35 // pred_check_branch
          %283 = sbr.rel (%p281) target = $region40
        $region39: #{tpu_custom_call.1} parent=35 // pred_region
          %v285 = vlaneseq
          %v286 = vand.u32 %v285, 127
          %v287 = vlaneseq
          %v288 = vshrl.u32 %v287, 7
          %v289 = vsub.s32 %v286, %v288
          %v290 = vrot.slane %v254, %v289
          %vm292 = vcmask 57344
          %293 = vst.msk [vmem:[#allocation2] sm:$0x1] %vm292, %v290
          %v295 = vlaneseq
          %v296 = vshrl.u32 %v295, 7
          %v297 = vsub.s32 %v286, %v296
          %v298 = vrot.slane %v257, %v297
          %300 = vst.msk [vmem:[#allocation3] sm:$0x1] %vm292, %v298
          %v302 = vlaneseq
          %v303 = vshrl.u32 %v302, 7
          %v304 = vsub.s32 %v286, %v303
          %v305 = vrot.slane %v261, %v304
          %307 = vst.msk [vmem:[#allocation4] sm:$0x1] %vm292, %v305
          %v309 = vlaneseq
          %v310 = vshrl.u32 %v309, 7
          %v311 = vsub.s32 %v286, %v310
          %v312 = vrot.slane %v271, %v311
          %314 = vst.msk [vmem:[#allocation5] sm:$0x1] %vm292, %v312
          %v316 = vlaneseq
          %v317 = vshrl.u32 %v316, 7
          %v318 = vsub.s32 %v286, %v317
          %v319 = vrot.slane %v275, %v318
          %321 = vst.msk [vmem:[#allocation6] sm:$0x1] %vm292, %v319
          %vm322 = vcmask 0
          %323 = vst.msk [vmem:[#allocation7] sm:$0x1] %vm322, %v279
        $region40: #{tpu_custom_call.1} parent=35 // pred_fallthru
          _
        %p324 = scmp.gt.s32.totalorder %s23, 0
        // Predicated region
        $region41: #{tpu_custom_call.1} parent=35 // pred_check
          %p325 = pneg %p324
        $region42: #{tpu_custom_call.1} parent=35 // pred_check_branch
          %327 = sbr.rel (%p325) target = $region44
        $region43: #{tpu_custom_call.1} parent=35 // pred_region
          %v328 = vld [vmem:[#allocation2] sm:$0x1]
          %v330 = vlaneseq
          %v331 = vshrl.u32 %v330, 7
          %v332 = vsub.s32 0, %v331
          %v333 = vrot.slane %v254, %v332
          %v334 = vlaneseq
          %v335 = vshrl.u32 %v334, 7
          %v336 = vsub.s32 1, %v335
          %v337 = vrot.slane %v254, %v336
          %v338 = vlaneseq
          %v339 = vshrl.u32 %v338, 7
          %v340 = vsub.s32 2, %v339
          %v341 = vrot.slane %v254, %v340
          %v342 = vlaneseq
          %v343 = vshrl.u32 %v342, 7
          %v344 = vsub.s32 3, %v343
          %v345 = vrot.slane %v254, %v344
          %v346 = vlaneseq
          %v347 = vshrl.u32 %v346, 7
          %v348 = vsub.s32 4, %v347
          %v349 = vrot.slane %v254, %v348
          %v350 = vlaneseq
          %v351 = vshrl.u32 %v350, 7
          %v352 = vsub.s32 5, %v351
          %v353 = vrot.slane %v254, %v352
          %v354 = vlaneseq
          %v355 = vshrl.u32 %v354, 7
          %v356 = vsub.s32 6, %v355
          %v357 = vrot.slane %v254, %v356
          %v358 = vlaneseq
          %v359 = vshrl.u32 %v358, 7
          %v360 = vsub.s32 7, %v359
          %v361 = vrot.slane %v254, %v360
          %v362 = vcombine.low %v333, %v337
          %v363 = vcombine.low %v341, %v345
          %v364 = vcombine.low %v349, %v353
          %v365 = vcombine.low %v357, %v361
          %v367 = vunpack.c.l.s4 1966171168
          %v368 = vunpack.c.0.s8 %v367
          %v369 = vlaneseq
          %v370 = vshrl.u32 %v369, 7
          %v371 = vsub.s32 %v368, %v370
          %v372 = vrot.slane %v362, %v371
          %v374 = vunpack.c.l.s4 1966171168
          %v375 = vunpack.c.0.s8 %v374
          %v376 = vlaneseq
          %v377 = vshrl.u32 %v376, 7
          %v378 = vsub.s32 %v375, %v377
          %v379 = vrot.slane %v363, %v378
          %v381 = vunpack.c.l.s4 1966171168
          %v382 = vunpack.c.0.s8 %v381
          %v383 = vlaneseq
          %v384 = vshrl.u32 %v383, 7
          %v385 = vsub.s32 %v382, %v384
          %v386 = vrot.slane %v364, %v385
          %v388 = vunpack.c.l.s4 1966171168
          %v389 = vunpack.c.0.s8 %v388
          %v390 = vlaneseq
          %v391 = vshrl.u32 %v390, 7
          %v392 = vsub.s32 %v389, %v391
          %v393 = vrot.slane %v365, %v392
          %v394 = vcombine.low %v372, %v379
          %v395 = vcombine.low %v386, %v393
          %v397 = vunpack.c.l.s4 1966171168
          %v398 = vunpack.c.0.s8 %v397
          %v399 = vlaneseq
          %v400 = vshrl.u32 %v399, 7
          %v401 = vsub.s32 %v398, %v400
          %v402 = vrot.slane %v394, %v401
          %v404 = vunpack.c.l.s4 1966171168
          %v405 = vunpack.c.0.s8 %v404
          %v406 = vlaneseq
          %v407 = vshrl.u32 %v406, 7
          %v408 = vsub.s32 %v405, %v407
          %v409 = vrot.slane %v395, %v408
          %v410 = vcombine.low %v402, %v409
          %411 = vset.pattern.permute.xlu0 0
          %412 = vperm.xlu0 %411, %v410
          %v413 = vpop.permute.xlu0 %412
          %v414 = vlaneseq
          %v415 = vand.u32 %v414, 127
          %v416 = vlaneseq
          %v417 = vshrl.u32 %v416, 7
          %v418 = vsub.s32 %v415, %v417
          %v419 = vrot.slane %v413, %v418
          %v421 = vunpack.c.l.s4 1966171168
          %v422 = vunpack.c.0.s8 %v421
          %v423 = vlaneseq
          %v424 = vshrl.u32 %v423, 7
          %v425 = vsub.s32 %v422, %v424
          %v426 = vrot.slane %v419, %v425
          %v428 = vunpack.c.l.s4 1966171168
          %v429 = vunpack.c.0.s8 %v428
          %v430 = vlaneseq
          %v431 = vshrl.u32 %v430, 7
          %v432 = vsub.s32 %v429, %v431
          %v433 = vrot.slane %v426, %v432
          %v435 = vadd.f32 %v328, %v433
          %vm436 = vcmask 57344
          %437 = vst.msk [vmem:[#allocation2] sm:$0x1] %vm436, %v435
          %v438 = vld [vmem:[#allocation3] sm:$0x1]
          %v440 = vlaneseq
          %v441 = vshrl.u32 %v440, 7
          %v442 = vsub.s32 0, %v441
          %v443 = vrot.slane %v257, %v442
          %v444 = vlaneseq
          %v445 = vshrl.u32 %v444, 7
          %v446 = vsub.s32 1, %v445
          %v447 = vrot.slane %v257, %v446
          %v448 = vlaneseq
          %v449 = vshrl.u32 %v448, 7
          %v450 = vsub.s32 2, %v449
          %v451 = vrot.slane %v257, %v450
          %v452 = vlaneseq
          %v453 = vshrl.u32 %v452, 7
          %v454 = vsub.s32 3, %v453
          %v455 = vrot.slane %v257, %v454
          %v456 = vlaneseq
          %v457 = vshrl.u32 %v456, 7
          %v458 = vsub.s32 4, %v457
          %v459 = vrot.slane %v257, %v458
          %v460 = vlaneseq
          %v461 = vshrl.u32 %v460, 7
          %v462 = vsub.s32 5, %v461
          %v463 = vrot.slane %v257, %v462
          %v464 = vlaneseq
          %v465 = vshrl.u32 %v464, 7
          %v466 = vsub.s32 6, %v465
          %v467 = vrot.slane %v257, %v466
          %v468 = vlaneseq
          %v469 = vshrl.u32 %v468, 7
          %v470 = vsub.s32 7, %v469
          %v471 = vrot.slane %v257, %v470
          %v472 = vcombine.low %v443, %v447
          %v473 = vcombine.low %v451, %v455
          %v474 = vcombine.low %v459, %v463
          %v475 = vcombine.low %v467, %v471
          %v477 = vunpack.c.l.s4 1966171168
          %v478 = vunpack.c.0.s8 %v477
          %v479 = vlaneseq
          %v480 = vshrl.u32 %v479, 7
          %v481 = vsub.s32 %v478, %v480
          %v482 = vrot.slane %v472, %v481
          %v484 = vunpack.c.l.s4 1966171168
          %v485 = vunpack.c.0.s8 %v484
          %v486 = vlaneseq
          %v487 = vshrl.u32 %v486, 7
          %v488 = vsub.s32 %v485, %v487
          %v489 = vrot.slane %v473, %v488
          %v491 = vunpack.c.l.s4 1966171168
          %v492 = vunpack.c.0.s8 %v491
          %v493 = vlaneseq
          %v494 = vshrl.u32 %v493, 7
          %v495 = vsub.s32 %v492, %v494
          %v496 = vrot.slane %v474, %v495
          %v498 = vunpack.c.l.s4 1966171168
          %v499 = vunpack.c.0.s8 %v498
          %v500 = vlaneseq
          %v501 = vshrl.u32 %v500, 7
          %v502 = vsub.s32 %v499, %v501
          %v503 = vrot.slane %v475, %v502
          %v504 = vcombine.low %v482, %v489
          %v505 = vcombine.low %v496, %v503
          %v507 = vunpack.c.l.s4 1966171168
          %v508 = vunpack.c.0.s8 %v507
          %v509 = vlaneseq
          %v510 = vshrl.u32 %v509, 7
          %v511 = vsub.s32 %v508, %v510
          %v512 = vrot.slane %v504, %v511
          %v514 = vunpack.c.l.s4 1966171168
          %v515 = vunpack.c.0.s8 %v514
          %v516 = vlaneseq
          %v517 = vshrl.u32 %v516, 7
          %v518 = vsub.s32 %v515, %v517
          %v519 = vrot.slane %v505, %v518
          %v520 = vcombine.low %v512, %v519
          %521 = vset.pattern.permute.xlu0 0
          %522 = vperm.xlu0 %521, %v520
          %v523 = vpop.permute.xlu0 %522
          %v524 = vlaneseq
          %v525 = vshrl.u32 %v524, 7
          %v526 = vsub.s32 %v415, %v525
          %v527 = vrot.slane %v523, %v526
          %v529 = vunpack.c.l.s4 1966171168
          %v530 = vunpack.c.0.s8 %v529
          %v531 = vlaneseq
          %v532 = vshrl.u32 %v531, 7
          %v533 = vsub.s32 %v530, %v532
          %v534 = vrot.slane %v527, %v533
          %v536 = vunpack.c.l.s4 1966171168
          %v537 = vunpack.c.0.s8 %v536
          %v538 = vlaneseq
          %v539 = vshrl.u32 %v538, 7
          %v540 = vsub.s32 %v537, %v539
          %v541 = vrot.slane %v534, %v540
          %v543 = vadd.f32 %v438, %v541
          %544 = vst.msk [vmem:[#allocation3] sm:$0x1] %vm436, %v543
          %v545 = vld [vmem:[#allocation4] sm:$0x1]
          %v547 = vlaneseq
          %v548 = vshrl.u32 %v547, 7
          %v549 = vsub.s32 0, %v548
          %v550 = vrot.slane %v261, %v549
          %v551 = vlaneseq
          %v552 = vshrl.u32 %v551, 7
          %v553 = vsub.s32 1, %v552
          %v554 = vrot.slane %v261, %v553
          %v555 = vlaneseq
          %v556 = vshrl.u32 %v555, 7
          %v557 = vsub.s32 2, %v556
          %v558 = vrot.slane %v261, %v557
          %v559 = vlaneseq
          %v560 = vshrl.u32 %v559, 7
          %v561 = vsub.s32 3, %v560
          %v562 = vrot.slane %v261, %v561
          %v563 = vlaneseq
          %v564 = vshrl.u32 %v563, 7
          %v565 = vsub.s32 4, %v564
          %v566 = vrot.slane %v261, %v565
          %v567 = vlaneseq
          %v568 = vshrl.u32 %v567, 7
          %v569 = vsub.s32 5, %v568
          %v570 = vrot.slane %v261, %v569
          %v571 = vlaneseq
          %v572 = vshrl.u32 %v571, 7
          %v573 = vsub.s32 6, %v572
          %v574 = vrot.slane %v261, %v573
          %v575 = vlaneseq
          %v576 = vshrl.u32 %v575, 7
          %v577 = vsub.s32 7, %v576
          %v578 = vrot.slane %v261, %v577
          %v579 = vcombine.low %v550, %v554
          %v580 = vcombine.low %v558, %v562
          %v581 = vcombine.low %v566, %v570
          %v582 = vcombine.low %v574, %v578
          %v584 = vunpack.c.l.s4 1966171168
          %v585 = vunpack.c.0.s8 %v584
          %v586 = vlaneseq
          %v587 = vshrl.u32 %v586, 7
          %v588 = vsub.s32 %v585, %v587
          %v589 = vrot.slane %v579, %v588
          %v591 = vunpack.c.l.s4 1966171168
          %v592 = vunpack.c.0.s8 %v591
          %v593 = vlaneseq
          %v594 = vshrl.u32 %v593, 7
          %v595 = vsub.s32 %v592, %v594
          %v596 = vrot.slane %v580, %v595
          %v598 = vunpack.c.l.s4 1966171168
          %v599 = vunpack.c.0.s8 %v598
          %v600 = vlaneseq
          %v601 = vshrl.u32 %v600, 7
          %v602 = vsub.s32 %v599, %v601
          %v603 = vrot.slane %v581, %v602
          %v605 = vunpack.c.l.s4 1966171168
          %v606 = vunpack.c.0.s8 %v605
          %v607 = vlaneseq
          %v608 = vshrl.u32 %v607, 7
          %v609 = vsub.s32 %v606, %v608
          %v610 = vrot.slane %v582, %v609
          %v611 = vcombine.low %v589, %v596
          %v612 = vcombine.low %v603, %v610
          %v614 = vunpack.c.l.s4 1966171168
          %v615 = vunpack.c.0.s8 %v614
          %v616 = vlaneseq
          %v617 = vshrl.u32 %v616, 7
          %v618 = vsub.s32 %v615, %v617
          %v619 = vrot.slane %v611, %v618
          %v621 = vunpack.c.l.s4 1966171168
          %v622 = vunpack.c.0.s8 %v621
          %v623 = vlaneseq
          %v624 = vshrl.u32 %v623, 7
          %v625 = vsub.s32 %v622, %v624
          %v626 = vrot.slane %v612, %v625
          %v627 = vcombine.low %v619, %v626
          %628 = vset.pattern.permute.xlu0 0
          %629 = vperm.xlu0 %628, %v627
          %v630 = vpop.permute.xlu0 %629
          %v631 = vlaneseq
          %v632 = vshrl.u32 %v631, 7
          %v633 = vsub.s32 %v415, %v632
          %v634 = vrot.slane %v630, %v633
          %v636 = vunpack.c.l.s4 1966171168
          %v637 = vunpack.c.0.s8 %v636
          %v638 = vlaneseq
          %v639 = vshrl.u32 %v638, 7
          %v640 = vsub.s32 %v637, %v639
          %v641 = vrot.slane %v634, %v640
          %v643 = vunpack.c.l.s4 1966171168
          %v644 = vunpack.c.0.s8 %v643
          %v645 = vlaneseq
          %v646 = vshrl.u32 %v645, 7
          %v647 = vsub.s32 %v644, %v646
          %v648 = vrot.slane %v641, %v647
          %v650 = vadd.f32 %v545, %v648
          %651 = vst.msk [vmem:[#allocation4] sm:$0x1] %vm436, %v650
          %v652 = vld [vmem:[#allocation5] sm:$0x1]
          %v654 = vlaneseq
          %v655 = vshrl.u32 %v654, 7
          %v656 = vsub.s32 0, %v655
          %v657 = vrot.slane %v271, %v656
          %v658 = vlaneseq
          %v659 = vshrl.u32 %v658, 7
          %v660 = vsub.s32 1, %v659
          %v661 = vrot.slane %v271, %v660
          %v662 = vlaneseq
          %v663 = vshrl.u32 %v662, 7
          %v664 = vsub.s32 2, %v663
          %v665 = vrot.slane %v271, %v664
          %v666 = vlaneseq
          %v667 = vshrl.u32 %v666, 7
          %v668 = vsub.s32 3, %v667
          %v669 = vrot.slane %v271, %v668
          %v670 = vlaneseq
          %v671 = vshrl.u32 %v670, 7
          %v672 = vsub.s32 4, %v671
          %v673 = vrot.slane %v271, %v672
          %v674 = vlaneseq
          %v675 = vshrl.u32 %v674, 7
          %v676 = vsub.s32 5, %v675
          %v677 = vrot.slane %v271, %v676
          %v678 = vlaneseq
          %v679 = vshrl.u32 %v678, 7
          %v680 = vsub.s32 6, %v679
          %v681 = vrot.slane %v271, %v680
          %v682 = vlaneseq
          %v683 = vshrl.u32 %v682, 7
          %v684 = vsub.s32 7, %v683
          %v685 = vrot.slane %v271, %v684
          %v686 = vcombine.low %v657, %v661
          %v687 = vcombine.low %v665, %v669
          %v688 = vcombine.low %v673, %v677
          %v689 = vcombine.low %v681, %v685
          %v691 = vunpack.c.l.s4 1966171168
          %v692 = vunpack.c.0.s8 %v691
          %v693 = vlaneseq
          %v694 = vshrl.u32 %v693, 7
          %v695 = vsub.s32 %v692, %v694
          %v696 = vrot.slane %v686, %v695
          %v698 = vunpack.c.l.s4 1966171168
          %v699 = vunpack.c.0.s8 %v698
          %v700 = vlaneseq
          %v701 = vshrl.u32 %v700, 7
          %v702 = vsub.s32 %v699, %v701
          %v703 = vrot.slane %v687, %v702
          %v705 = vunpack.c.l.s4 1966171168
          %v706 = vunpack.c.0.s8 %v705
          %v707 = vlaneseq
          %v708 = vshrl.u32 %v707, 7
          %v709 = vsub.s32 %v706, %v708
          %v710 = vrot.slane %v688, %v709
          %v712 = vunpack.c.l.s4 1966171168
          %v713 = vunpack.c.0.s8 %v712
          %v714 = vlaneseq
          %v715 = vshrl.u32 %v714, 7
          %v716 = vsub.s32 %v713, %v715
          %v717 = vrot.slane %v689, %v716
          %v718 = vcombine.low %v696, %v703
          %v719 = vcombine.low %v710, %v717
          %v721 = vunpack.c.l.s4 1966171168
          %v722 = vunpack.c.0.s8 %v721
          %v723 = vlaneseq
          %v724 = vshrl.u32 %v723, 7
          %v725 = vsub.s32 %v722, %v724
          %v726 = vrot.slane %v718, %v725
          %v728 = vunpack.c.l.s4 1966171168
          %v729 = vunpack.c.0.s8 %v728
          %v730 = vlaneseq
          %v731 = vshrl.u32 %v730, 7
          %v732 = vsub.s32 %v729, %v731
          %v733 = vrot.slane %v719, %v732
          %v734 = vcombine.low %v726, %v733
          %735 = vset.pattern.permute.xlu0 0
          %736 = vperm.xlu0 %735, %v734
          %v737 = vpop.permute.xlu0 %736
          %v738 = vlaneseq
          %v739 = vshrl.u32 %v738, 7
          %v740 = vsub.s32 %v415, %v739
          %v741 = vrot.slane %v737, %v740
          %v743 = vunpack.c.l.s4 1966171168
          %v744 = vunpack.c.0.s8 %v743
          %v745 = vlaneseq
          %v746 = vshrl.u32 %v745, 7
          %v747 = vsub.s32 %v744, %v746
          %v748 = vrot.slane %v741, %v747
          %v750 = vunpack.c.l.s4 1966171168
          %v751 = vunpack.c.0.s8 %v750
          %v752 = vlaneseq
          %v753 = vshrl.u32 %v752, 7
          %v754 = vsub.s32 %v751, %v753
          %v755 = vrot.slane %v748, %v754
          %v757 = vmin.f32 %v652, %v755
          %758 = vst.msk [vmem:[#allocation5] sm:$0x1] %vm436, %v757
          %v759 = vld [vmem:[#allocation6] sm:$0x1]
          %v761 = vlaneseq
          %v762 = vshrl.u32 %v761, 7
          %v763 = vsub.s32 0, %v762
          %v764 = vrot.slane %v275, %v763
          %v765 = vlaneseq
          %v766 = vshrl.u32 %v765, 7
          %v767 = vsub.s32 1, %v766
          %v768 = vrot.slane %v275, %v767
          %v769 = vlaneseq
          %v770 = vshrl.u32 %v769, 7
          %v771 = vsub.s32 2, %v770
          %v772 = vrot.slane %v275, %v771
          %v773 = vlaneseq
          %v774 = vshrl.u32 %v773, 7
          %v775 = vsub.s32 3, %v774
          %v776 = vrot.slane %v275, %v775
          %v777 = vlaneseq
          %v778 = vshrl.u32 %v777, 7
          %v779 = vsub.s32 4, %v778
          %v780 = vrot.slane %v275, %v779
          %v781 = vlaneseq
          %v782 = vshrl.u32 %v781, 7
          %v783 = vsub.s32 5, %v782
          %v784 = vrot.slane %v275, %v783
          %v785 = vlaneseq
          %v786 = vshrl.u32 %v785, 7
          %v787 = vsub.s32 6, %v786
          %v788 = vrot.slane %v275, %v787
          %v789 = vlaneseq
          %v790 = vshrl.u32 %v789, 7
          %v791 = vsub.s32 7, %v790
          %v792 = vrot.slane %v275, %v791
          %v793 = vcombine.low %v764, %v768
          %v794 = vcombine.low %v772, %v776
          %v795 = vcombine.low %v780, %v784
          %v796 = vcombine.low %v788, %v792
          %v798 = vunpack.c.l.s4 1966171168
          %v799 = vunpack.c.0.s8 %v798
          %v800 = vlaneseq
          %v801 = vshrl.u32 %v800, 7
          %v802 = vsub.s32 %v799, %v801
          %v803 = vrot.slane %v793, %v802
          %v805 = vunpack.c.l.s4 1966171168
          %v806 = vunpack.c.0.s8 %v805
          %v807 = vlaneseq
          %v808 = vshrl.u32 %v807, 7
          %v809 = vsub.s32 %v806, %v808
          %v810 = vrot.slane %v794, %v809
          %v812 = vunpack.c.l.s4 1966171168
          %v813 = vunpack.c.0.s8 %v812
          %v814 = vlaneseq
          %v815 = vshrl.u32 %v814, 7
          %v816 = vsub.s32 %v813, %v815
          %v817 = vrot.slane %v795, %v816
          %v819 = vunpack.c.l.s4 1966171168
          %v820 = vunpack.c.0.s8 %v819
          %v821 = vlaneseq
          %v822 = vshrl.u32 %v821, 7
          %v823 = vsub.s32 %v820, %v822
          %v824 = vrot.slane %v796, %v823
          %v825 = vcombine.low %v803, %v810
          %v826 = vcombine.low %v817, %v824
          %v828 = vunpack.c.l.s4 1966171168
          %v829 = vunpack.c.0.s8 %v828
          %v830 = vlaneseq
          %v831 = vshrl.u32 %v830, 7
          %v832 = vsub.s32 %v829, %v831
          %v833 = vrot.slane %v825, %v832
          %v835 = vunpack.c.l.s4 1966171168
          %v836 = vunpack.c.0.s8 %v835
          %v837 = vlaneseq
          %v838 = vshrl.u32 %v837, 7
          %v839 = vsub.s32 %v836, %v838
          %v840 = vrot.slane %v826, %v839
          %v841 = vcombine.low %v833, %v840
          %842 = vset.pattern.permute.xlu0 0
          %843 = vperm.xlu0 %842, %v841
          %v844 = vpop.permute.xlu0 %843
          %v845 = vlaneseq
          %v846 = vshrl.u32 %v845, 7
          %v847 = vsub.s32 %v415, %v846
          %v848 = vrot.slane %v844, %v847
          %v850 = vunpack.c.l.s4 1966171168
          %v851 = vunpack.c.0.s8 %v850
          %v852 = vlaneseq
          %v853 = vshrl.u32 %v852, 7
          %v854 = vsub.s32 %v851, %v853
          %v855 = vrot.slane %v848, %v854
          %v857 = vunpack.c.l.s4 1966171168
          %v858 = vunpack.c.0.s8 %v857
          %v859 = vlaneseq
          %v860 = vshrl.u32 %v859, 7
          %v861 = vsub.s32 %v858, %v860
          %v862 = vrot.slane %v855, %v861
          %v864 = vmax.f32 %v759, %v862
          %865 = vst.msk [vmem:[#allocation6] sm:$0x1] %vm436, %v864
          %v866 = vld [vmem:[#allocation7] sm:$0x1]
          %v867 = vadd.f32 %v866, %v279
          %vm868 = vcmask 0
          %869 = vst.msk [vmem:[#allocation7] sm:$0x1] %vm868, %v867
        $region44: #{tpu_custom_call.1} parent=35 // pred_fallthru
          _
        // Predicated region
        $region45: #{tpu_custom_call.1} parent=35 // pred_check
          %p870 = pneg %p280
        $region46: #{tpu_custom_call.1} parent=35 // pred_check_branch
          %872 = sbr.rel (%p870) target = $region48
        $region47: #{tpu_custom_call.1} parent=35 // pred_region
          %v873 = vld [vmem:[#allocation7] sm:$0x1]
          %v874 = vrcp.pop %v873
          %v875 = vmul.f32 1.0, %v874
          %v876 = vld [vmem:[#allocation2] sm:$0x1]
          %878 = vset.pattern.permute.xlu0 0
          %879 = vperm.xlu0 %878, %v875
          %v880 = vpop.permute.xlu0 %879
          %v882 = vlaneseq
          %v883 = vshrl.u32 %v882, 7
          %v884 = vsub.s32 0, %v883
          %v885 = vrot.slane %v880, %v884
          %v886 = vmul.f32 %v876, %v885
          %v887 = vld [vmem:[#allocation4] sm:$0x1]
          %v888 = vmul.f32 %v886, 2.0
          %v889 = vld [vmem:[#allocation3] sm:$0x1]
          %v890 = vmul.f32 %v888, %v889
          %v891 = vsub.f32 %v887, %v890
          %v892 = vmul.f32 %v886, %v886
          %894 = vset.pattern.permute.xlu0 0
          %895 = vperm.xlu0 %894, %v873
          %v896 = vpop.permute.xlu0 %895
          %v898 = vlaneseq
          %v899 = vshrl.u32 %v898, 7
          %v900 = vsub.s32 0, %v899
          %v901 = vrot.slane %v896, %v900
          %v902 = vmul.f32 %v892, %v901
          %v903 = vadd.f32 %v891, %v902
          %v904 = vmul.f32 %v903, %v885
          %v905 = vld [vmem:[#allocation5] sm:$0x1]
          %v906 = vld [vmem:[#allocation6] sm:$0x1]
          %v908 = vlaneseq
          %v909 = vshrl.u32 %v908, 7
          %v910 = vsub.s32 0, %v909
          %v911 = vrot.slane %v905, %v910
          %912 = vrot.lane.b32.xlu0 %v911, 8
          %v913 = vpop.permute.xlu0 %912
          %v916 = vlaneseq
          %v917 = vshrl.u32 %v916, 7
          %v918 = vsub.s32 0, %v917
          %v919 = vrot.slane %v906, %v918
          %920 = vrot.lane.b32.xlu0 %v919, 16
          %v921 = vpop.permute.xlu0 %920
          %v924 = vlaneseq
          %v925 = vshrl.u32 %v924, 7
          %v926 = vsub.s32 0, %v925
          %v927 = vrot.slane %v904, %v926
          %928 = vrot.lane.b32.xlu0 %v927, 24
          %v929 = vpop.permute.xlu0 %928
          %vm931 = vcmask 64512
          %v932 = vsel %vm931, %v886, %v913
          %vm933 = vcmask 130048
          %v934 = vsel %vm933, %v932, %v921
          %vm935 = vcmask 195584
          %v936 = vsel %vm935, %v934, %v929
          %v937 = vld [vmem:[%s2] sm:$0xff]
          %v938 = vld [vmem:[%s2 + $0x8] sm:$0xff]
          %v939 = vld [vmem:[%s2 + $0x10] sm:$0xff]
          %v940 = vld [vmem:[%s2 + $0x18] sm:$0xff]
          %v941 = vld [vmem:[%s3] sm:$0x1]
          %vm942 = vcmask 261120
          %v944 = vsel %vm942, %v936, 0
          %946 = vmatprep.subr.mxu0 0.0
          %947 = vmatpush1.msra.mxu0 0.0
          %948 = vmatprep.subr.mxu0 0.0
          %949 = vmatpush1.msra.mxu0 0.0
          %950 = vmatprep.subr.mxu0 0.0
          %951 = vmatpush1.msra.mxu0 0.0
          %952 = vmatprep.subr.mxu0 0.0
          %953 = vmatpush1.msra.mxu0 0.0
          %954 = vmatprep.subr.mxu0 0.0
          %955 = vmatpush1.msra.mxu0 0.0
          %956 = vmatprep.subr.mxu0 0.0
          %957 = vmatpush1.msra.mxu0 0.0
          %958 = vmatprep.subr.mxu0 0.0
          %959 = vmatpush1.msra.mxu0 0.0
          %960 = vmatprep.subr.mxu0 0.0
          %961 = vmatpush1.msra.mxu0 0.0
          %962 = vmatprep.subr.mxu0 0.0
          %963 = vmatpush1.msra.mxu0 0.0
          %964 = vmatprep.subr.mxu0 0.0
          %965 = vmatpush1.msra.mxu0 0.0
          %966 = vmatprep.subr.mxu0 0.0
          %967 = vmatpush1.msra.mxu0 0.0
          %968 = vmatprep.subr.mxu0 0.0
          %969 = vmatpush1.msra.mxu0 0.0
          %970 = vmatprep.subr.mxu0 0.0
          %971 = vmatpush1.msra.mxu0 %v940
          %972 = vmatprep.subr.mxu0 0.0
          %973 = vmatpush1.msra.mxu0 %v939
          %974 = vmatprep.subr.mxu0 0.0
          %975 = vmatpush1.msra.mxu0 %v938
          %976 = vmatprep.subr.mxu0 0.0
          %977 = vmatpush1.msra.mxu0 %v937
          %978 = vmatprep.subr.mxu0 0.0
          %979 = vmatpush2.msra.mxu0 0.0
          %980 = vmatprep.subr.mxu0 0.0
          %981 = vmatpush2.msra.mxu0 0.0
          %982 = vmatprep.subr.mxu0 0.0
          %983 = vmatpush2.msra.mxu0 0.0
          %984 = vmatprep.subr.mxu0 0.0
          %985 = vmatpush2.msra.mxu0 0.0
          %986 = vmatprep.subr.mxu0 0.0
          %987 = vmatpush2.msra.mxu0 0.0
          %988 = vmatprep.subr.mxu0 0.0
          %989 = vmatpush2.msra.mxu0 0.0
          %990 = vmatprep.subr.mxu0 0.0
          %991 = vmatpush2.msra.mxu0 0.0
          %992 = vmatprep.subr.mxu0 0.0
          %993 = vmatpush2.msra.mxu0 0.0
          %994 = vmatprep.subr.mxu0 0.0
          %995 = vmatpush2.msra.mxu0 0.0
          %996 = vmatprep.subr.mxu0 0.0
          %997 = vmatpush2.msra.mxu0 0.0
          %998 = vmatprep.subr.mxu0 0.0
          %999 = vmatpush2.msra.mxu0 0.0
          %1000 = vmatprep.subr.mxu0 0.0
          %1001 = vmatpush2.msra.mxu0 0.0
          %1002 = vmatprep.subr.mxu0 0.0
          %1003 = vmatpush2.msra.mxu0 0.0
          %1004 = vmatprep.subr.mxu0 0.0
          %1005 = vmatpush2.msra.mxu0 0.0
          %1006 = vmatprep.subr.mxu0 0.0
          %1007 = vmatpush2.msra.mxu0 0.0
          %1008 = vmatprep.subr.mxu0 0.0
          %1009 = vmatpush2.msra.mxu0 0.0
          %1010 = vmatprep.mubr.f32.mxu0 0.0
          %1011 = vmatmul.mubr.f32.gmra.mxu0 %v944
          %v1012 = vpop.f32.mrf.mxu0
          %v1013 = vadd.f32 %v941, %v1012
          %v1014 = vpop.f32.mrf.mxu0
          %1015 = vdwg.mxu0
          %vm1016 = vcmask 122880
          %1017 = vst.msk [vmem:[%s226] sm:$0x1] %vm1016, %v1013
        $region48: #{tpu_custom_call.1} parent=35 // pred_fallthru
          _
        %s1018 = sand.u32 %s136, 1
        %s1019 = scalar_lea.sflag [#allocation9], %s1018
        %s1020 = sand.u32 %s136, 1
        %s1021 = scalar_lea.vmem [#allocation8], %s1020
        // Predicated region
        $region49: #{tpu_custom_call.1} parent=35 // pred_check
          %p1022 = pneg %p146
        $region50: #{tpu_custom_call.1} parent=35 // pred_check_branch
          %1024 = sbr.rel (%p1022) target = $region52
        $region51: #{tpu_custom_call.1} parent=35 // pred_region
          %s1026 = ssub.s32 16, 16
          %1027 = vsyncadd %s1019, %s1026
          %s1028 = smul.addr %s22, 16
          %s1029 = scalar_lea.hbm %s4, %s1028
          %s1031 = sshll.u32 %s1021, 4
          %s1032 = int_to_ptr.vmem [resolvable:$true] %s1031
          %1034 = dma.vmem_to_hbm [thread:$0]  %s1032, 16, %s1029, %s1019
        $region52: #{tpu_custom_call.1} parent=35 // pred_fallthru
          _
      $region36: #{tpu_custom_call.1} parent=5 // pred_fallthru
        _
      %p1035 = scmp.le.s32.totalorder 2, %s13
      // Predicated region
      $region53: #{tpu_custom_call.1} parent=5 // pred_check
        %p1036 = pneg %p1035
      $region54: #{tpu_custom_call.1} parent=5 // pred_check_branch
        %1038 = sbr.rel (%p1036) target = $region56
      $region55: #{tpu_custom_call.1} parent=5 // pred_region
        %s1039 = ssub.s32 %s13, 2
        // Predicated region
        $region57: #{tpu_custom_call.1} parent=55 // pred_check
          %p1040 = pneg %p152
        $region58: #{tpu_custom_call.1} parent=55 // pred_check_branch
          %1042 = sbr.rel (%p1040) target = $region60
        $region59: #{tpu_custom_call.1} parent=55 // pred_region
          %s1043 = sand.u32 %s137, 1
          %s1044 = scalar_lea.sflag [#allocation9], %s1043
          %s1045 = sand.u32 %s137, 1
          %s1046 = scalar_lea.vmem [#allocation8], %s1045
          %1047 = dma.done %s1044, 16
        $region60: #{tpu_custom_call.1} parent=55 // pred_fallthru
          _
      $region56: #{tpu_custom_call.1} parent=5 // pred_fallthru
        _
    $region6: #{tpu_custom_call.1} parent=1 // loop_footer
      %s17 = sadd.s32 1, %s13
    $region7: #{tpu_custom_call.1} parent=1 // loop_footer_branch
      %12 = sbr.rel target = $region3
    $region8: #{tpu_custom_call.1} parent=1 // loop_exit
      _
    %1048 = vsyncpa [#allocation9], 1
    %s1049 = scalar_lea.sflag [#allocation9], 1
    %1050 = vsyncpa %s1049, 1

</llo_original>
